<compile_context>
chip_gen: v5e
topology: v5e:2x2
jax: 0.10.0
libtpu: 0.0.40
codegen_flags: <defaults>
</compile_context>

<pallas_src>
import functools

import jax
import jax.numpy as jnp
from jax import lax
from jax.experimental import pallas as pl
from jax.experimental.pallas import tpu as pltpu


def _round_up(x, m):
    return ((x + m - 1) // m) * m


def _vmem_limit_bytes():
    """Per-generation VMEM budget: ~3/4 of physical, capped at 96 MiB."""
    try:
        cap = getattr(pltpu.get_tpu_info(), "vmem_capacity_bytes", None)
    except Exception:
        cap = None
    if not cap:
        return 64 * 1024 * 1024          # safe default (v5e/v6e)
    return int(min(cap * 3 // 4, 96 * 1024 * 1024))   # v7x: 48 MiB, v5e/v6e: 96 MiB


def _resident_spec(shape):
    """Constant-index (VMEM-resident) weight block, single-buffered."""
    idx = lambda b, s: (0, 0)
    try:
        return pl.BlockSpec(shape, idx, pipeline_mode=pl.Buffered(1))
    except (TypeError, AttributeError):   # pipeline_mode unavailable -> default
        return pl.BlockSpec(shape, idx)


def _multihead_kernel(x_ref, w1_ref, b1_ref, w2_ref, b2_ref,
                      out_ref, sum_ref, *, inv_s, seq_len, ts):
    """x_ref: (TB, TS, H) block; both heads run once per B-tile at the last S step."""
    s = pl.program_id(1)

    @pl.when(s == 0)
    def _():
        sum_ref[...] = jnp.zeros_like(sum_ref)

    # Running seq-sum in f32 (x may be bf16); sublane reduction rides on XLU
    # and is fully hidden under the x DMA (bandwidth-bound).
    xb = x_ref[...].astype(jnp.float32)                              # [TB, TS, H]
    if seq_len % ts != 0:
        # Ragged S tail: out-of-bounds rows of the last block hold garbage —
        # mask them instead of zero-padding x in HBM.
        pos = lax.broadcasted_iota(jnp.int32, xb.shape[1:], 0) + s * ts
        xb = jnp.where((pos < seq_len)[None], xb, 0.0)
    sum_ref[...] += jnp.sum(xb, axis=1)

    @pl.when(s == pl.num_programs(1) - 1)
    def _():
        # Mean over the TRUE sequence length; cast to weight dtype for the MXU.
        emb = (sum_ref[...] * inv_s).astype(w1_ref.dtype)            # [TB, H]
        # Fused first layer of both heads: [H, H] = w1 || w3, then ReLU.
        h = jnp.dot(emb, w1_ref[...], preferred_element_type=jnp.float32)
        h = jnp.maximum(h + b1_ref[...], 0.0)                        # [TB, H] f32
        # Dropout(0.1) == identity in eval mode.
        # Fused, lane-dense second layer: block-diag(w2, w4) padded to 128 lanes.
        out = jnp.dot(h.astype(w2_ref.dtype), w2_ref[...],
                      preferred_element_type=jnp.float32)
        out_ref[...] = (out + b2_ref[...]).astype(out_ref.dtype)     # [TB, 128]


def fuse_params(params, param_dtype=jnp.bfloat16):
    """One-time head-weight fusion (hoisted out of the per-call path)."""
    w1, b1, w2, b2, w3, b3, w4, b4 = params
    H, half = w1.shape
    c1, c2 = w2.shape[1], w4.shape[1]
    c_pad = max(128, _round_up(c1 + c2, 128))            # lane-dense output width

    # First layers of both heads -> one [H, 2*half] GEMM (bf16 weights on MXU).
    w_cat = jnp.concatenate([w1, w3], axis=1).astype(param_dtype)
    b_cat = jnp.concatenate([b1, b3], axis=1).astype(jnp.float32)

    # Second layers -> one block-diagonal, lane-dense [2*half, c_pad] GEMM.
    w_blk = jnp.zeros((2 * half, c_pad), jnp.float32)
    w_blk = w_blk.at[:half, :c1].set(w2).at[half:, c1:c1 + c2].set(w4)
    w_blk = w_blk.astype(param_dtype)
    b_blk = jnp.zeros((1, c_pad), jnp.float32)
    b_blk = b_blk.at[:, :c1].set(b2).at[:, c1:c1 + c2].set(b4)
    return (w_cat, b_cat, w_blk, b_blk), (c1, c2, c_pad)


def multihead_sentence_transformer(last_hidden_state, fused_params, head_dims,
                                   *, tb=32, ts=128):
    """last_hidden_state: [B, S, H] (bf16 preferred, f32 supported).

    Returns (classifier_logits [B, c1], sentiment_logits [B, c2]) in f32.
    """
    x = last_hidden_state
    B, S, H = x.shape
    w_cat, b_cat, w_blk, b_blk = fused_params
    c1, c2, c_pad = head_dims

    # --- tiling: B parallel, S reduction. x is NEVER padded/copied in HBM. ---
    sub = 16 if x.dtype == jnp.bfloat16 else 8            # bf16 packs 2 rows/sublane
    assert tb % 8 == 0 and ts % sub == 0
    TS = S if S <= ts else ts                             # full-dim block if seq fits
    b_ceil = _round_up(B, 8)
    TB = min(tb, b_ceil)
    if b_ceil >= 16 and b_ceil // TB < 2:
        # Keep >= 2 B-tiles so the "parallel" axis shards across both v7x TCs.
        TB = max(8, _round_up((b_ceil + 1) // 2, 8))
    grid = (pl.cdiv(B, TB), pl.cdiv(S, TS))
    B_out = grid[0] * TB          # only the tiny f32 output is padded; ragged
                                  # x tiles are masked (S) or sliced off (B).

    kernel = functools.partial(_multihead_kernel, inv_s=1.0 / S, seq_len=S, ts=TS)

    out = pl.pallas_call(
        kernel,
        out_shape=jax.ShapeDtypeStruct((B_out, c_pad), jnp.float32),
        grid_spec=pltpu.PrefetchScalarGridSpec(
            num_scalar_prefetch=0,
            grid=grid,
            in_specs=[
                pl.BlockSpec((TB, TS, H), lambda b, s: (b, s, 0)),   # x stream
                _resident_spec(w_cat.shape),                         # VMEM-resident
                _resident_spec(b_cat.shape),
                _resident_spec(w_blk.shape),
                _resident_spec(b_blk.shape),
            ],
            out_specs=pl.BlockSpec((TB, c_pad), lambda b, s: (b, 0)),  # resident over s
            scratch_shapes=[pltpu.VMEM((TB, H), jnp.float32)],         # f32 pool accum
        ),
        compiler_params=pltpu.CompilerParams(
            dimension_semantics=("parallel", "arbitrary"),
            vmem_limit_bytes=_vmem_limit_bytes(),
        ),
    )(x, w_cat, b_cat, w_blk, b_blk)

    return out[:B, :c1], out[:B, c1:c1 + c2]


def init_params(key, hidden_size, num_classes_1=2, num_classes_2=3):
    """Deterministic parameter init mimicking nn.Linear shapes (stored as [in, out])."""
    half = hidden_size // 2
    ks = jax.random.split(key, 8)

    def lin(kw, kb, fan_in, fan_out):
        bound = 1.0 / jnp.sqrt(fan_in)
        w = jax.random.uniform(kw, (fan_in, fan_out), jnp.float32, -bound, bound)
        b = jax.random.uniform(kb, (1, fan_out), jnp.float32, -bound, bound)
        return w, b

    w1, b1 = lin(ks[0], ks[1], hidden_size, half)          # classifier_head[0]
    w2, b2 = lin(ks[2], ks[3], half, num_classes_1)        # classifier_head[3]
    w3, b3 = lin(ks[4], ks[5], hidden_size, half)          # sentiment_head[0]
    w4, b4 = lin(ks[6], ks[7], half, num_classes_2)        # sentiment_head[3]
    return (w1, b1, w2, b2, w3, b3, w4, b4)


def reference_forward(x, params):
    """Pure-JAX reference for correctness check (unfused, f32 weights)."""
    (w1, b1, w2, b2, w3, b3, w4, b4) = params
    emb = jnp.mean(x.astype(jnp.float32), axis=1)
    h1 = jnp.maximum(emb @ w1 + b1, 0.0)
    cls = h1 @ w2 + b2
    h2 = jnp.maximum(emb @ w3 + b3, 0.0)
    sent = h2 @ w4 + b4
    return cls, sent


if __name__ == "__main__":
    key = jax.random.PRNGKey(0)
    kx1, kx2, kp1, kp2 = jax.random.split(key, 4)

    # --- canonical small shapes: batch=2, seq=8, hidden=32 --------------------
    B, S, H = 2, 8, 32
    # bf16 end-to-end (a real encoder would emit bf16 directly; no extra cast op).
    x = jax.random.normal(kx1, (B, S, H), jnp.bfloat16)
    params = init_params(kp1, H, num_classes_1=2, num_classes_2=3)
    fused, dims = fuse_params(params)                     # hoisted, done once
    cls_logits, sent_logits = multihead_sentence_transformer(x, fused, dims)
    jax.block_until_ready((cls_logits, sent_logits))

    cls_ref, sent_ref = reference_forward(x, params)
    assert cls_logits.shape == (B, 2) and sent_logits.shape == (B, 3)
    # Kernel uses bf16 weights/activations on the MXU -> tolerance reflects bf16.
    assert jnp.allclose(cls_logits, cls_ref, atol=2e-2, rtol=2e-2)
    assert jnp.allclose(sent_logits, sent_ref, atol=2e-2, rtol=2e-2)

    # --- ragged tiles: exercises the in-kernel S mask + partial B tile --------
    B2, S2, H2 = 20, 40, 64
    x2 = jax.random.normal(kx2, (B2, S2, H2), jnp.bfloat16)
    params2 = init_params(kp2, H2, num_classes_1=2, num_classes_2=3)
    fused2, dims2 = fuse_params(params2)
    cls2, sent2 = multihead_sentence_transformer(x2, fused2, dims2, tb=32, ts=16)
    jax.block_until_ready((cls2, sent2))

    cls2_ref, sent2_ref = reference_forward(x2, params2)
    assert cls2.shape == (B2, 2) and sent2.shape == (B2, 3)
    assert jnp.allclose(cls2, cls2_ref, atol=2e-2, rtol=2e-2)
    assert jnp.allclose(sent2, sent2_ref, atol=2e-2, rtol=2e-2)

    print("KERNEL_OK")
</pallas_src>

<mosaic_0001>
module attributes {stable_mosaic.version = 11 : i64} {
  func.func @_multihead_kernel(%arg0: i32, %arg1: i32, %arg2: memref<8x8x32xbf16, #tpu.memory_space<vmem>>, %arg3: memref<32x32xbf16, #tpu.memory_space<vmem>>, %arg4: memref<1x32xf32, #tpu.memory_space<vmem>>, %arg5: memref<32x128xbf16, #tpu.memory_space<vmem>>, %arg6: memref<1x128xf32, #tpu.memory_space<vmem>>, %arg7: memref<8x128xf32, #tpu.memory_space<vmem>>, %arg8: memref<8x32xf32, #tpu.memory_space<vmem>>) attributes {dimension_semantics = [#tpu.dimension_semantics<parallel>, #tpu.dimension_semantics<arbitrary>], iteration_bounds = array<i64: 1, 1>, scalar_prefetch = 0 : i64, scratch_operands = 1 : i64, tpu.core_type = #tpu.core_type<tc>, window_params = [{transform_indices = @transform_0, window_bounds = array<i64: 8, 8, 32>}, {pipeline_mode = #tpu.pipeline_mode<synchronous>, transform_indices = @transform_1, window_bounds = array<i64: 32, 32>}, {pipeline_mode = #tpu.pipeline_mode<synchronous>, transform_indices = @transform_2, window_bounds = array<i64: 1, 32>}, {pipeline_mode = #tpu.pipeline_mode<synchronous>, transform_indices = @transform_3, window_bounds = array<i64: 32, 128>}, {pipeline_mode = #tpu.pipeline_mode<synchronous>, transform_indices = @transform_4, window_bounds = array<i64: 1, 128>}, {transform_indices = @transform_5, window_bounds = array<i64: 8, 128>}]} {
    %c0_i32 = arith.constant 0 : i32
    %0 = arith.cmpi eq, %arg1, %c0_i32 : i32
    %1 = arith.extui %0 : i1 to i32
    %c0_i32_0 = arith.constant 0 : i32
    %2 = arith.cmpi ne, %1, %c0_i32_0 : i32
    scf.if %2 {
      %cst_9 = arith.constant 0.000000e+00 : f32
      %12 = vector.broadcast %cst_9 : f32 to vector<8x32xf32>
      %c0_10 = arith.constant 0 : index
      %c0_11 = arith.constant 0 : index
      %13 = vector.load %arg8[%c0_10, %c0_11] : memref<8x32xf32, #tpu.memory_space<vmem>>, vector<8x32xf32>
      tpu.vector_store %arg8[%c0_10, %c0_11], %12 {strides = array<i32>} : memref<8x32xf32, #tpu.memory_space<vmem>>, vector<8x32xf32>,
    } else {
    }
    %c0 = arith.constant 0 : index
    %c0_1 = arith.constant 0 : index
    %c0_2 = arith.constant 0 : index
    %3 = vector.load %arg2[%c0, %c0_1, %c0_2] : memref<8x8x32xbf16, #tpu.memory_space<vmem>>, vector<8x8x32xbf16>
    %4 = arith.extf %3 : vector<8x8x32xbf16> to vector<8x8x32xf32>
    %c0_3 = arith.constant 0 : index
    %c0_4 = arith.constant 0 : index
    %5 = vector.load %arg8[%c0_3, %c0_4] : memref<8x32xf32, #tpu.memory_space<vmem>>, vector<8x32xf32>
    %cst = arith.constant dense<0.000000e+00> : vector<8x32xf32>
    %6 = vector.multi_reduction <add>, %4, %cst [1] : vector<8x8x32xf32> to vector<8x32xf32>
    %7 = arith.addf %5, %6 : vector<8x32xf32>
    %c0_5 = arith.constant 0 : index
    %c0_6 = arith.constant 0 : index
    %8 = vector.load %arg8[%c0_5, %c0_6] : memref<8x32xf32, #tpu.memory_space<vmem>>, vector<8x32xf32>
    tpu.vector_store %arg8[%c0_5, %c0_6], %7 {strides = array<i32>} : memref<8x32xf32, #tpu.memory_space<vmem>>, vector<8x32xf32>,
    %c0_i32_7 = arith.constant 0 : i32
    %9 = arith.cmpi eq, %arg1, %c0_i32_7 : i32
    %10 = arith.extui %9 : i1 to i32
    %c0_i32_8 = arith.constant 0 : i32
    %11 = arith.cmpi ne, %10, %c0_i32_8 : i32
    scf.if %11 {
      %c0_9 = arith.constant 0 : index
      %c0_10 = arith.constant 0 : index
      %12 = vector.load %arg8[%c0_9, %c0_10] : memref<8x32xf32, #tpu.memory_space<vmem>>, vector<8x32xf32>
      %cst_11 = arith.constant 1.250000e-01 : f32
      %13 = vector.broadcast %cst_11 : f32 to vector<8x32xf32>
      %14 = arith.mulf %12, %13 : vector<8x32xf32>
      %15 = arith.truncf %14 : vector<8x32xf32> to vector<8x32xbf16>
      %c0_12 = arith.constant 0 : index
      %c0_13 = arith.constant 0 : index
      %16 = vector.load %arg3[%c0_12, %c0_13] : memref<32x32xbf16, #tpu.memory_space<vmem>>, vector<32x32xbf16>
      %cst_14 = arith.constant dense<0.000000e+00> : vector<8x32xf32>
      %17 = tpu.matmul %15, %16, %cst_14 {dimension_numbers = #tpu.dot_dimension_numbers<[1], [0], [0], [1], [0, 0, 1, 1], [], []>} : vector<8x32xbf16>, vector<32x32xbf16>, vector<8x32xf32> -> vector<8x32xf32>
      %c0_15 = arith.constant 0 : index
      %c0_16 = arith.constant 0 : index
      %18 = vector.load %arg4[%c0_15, %c0_16] : memref<1x32xf32, #tpu.memory_space<vmem>>, vector<1x32xf32>
      %19 = vector.broadcast %18 : vector<1x32xf32> to vector<8x32xf32>
      %20 = arith.addf %17, %19 : vector<8x32xf32>
      %cst_17 = arith.constant 0.000000e+00 : f32
      %21 = vector.broadcast %cst_17 : f32 to vector<8x32xf32>
      %22 = arith.maximumf %20, %21 : vector<8x32xf32>
      %23 = arith.truncf %22 : vector<8x32xf32> to vector<8x32xbf16>
      %c0_18 = arith.constant 0 : index
      %c0_19 = arith.constant 0 : index
      %24 = vector.load %arg5[%c0_18, %c0_19] : memref<32x128xbf16, #tpu.memory_space<vmem>>, vector<32x128xbf16>
      %cst_20 = arith.constant dense<0.000000e+00> : vector<8x128xf32>
      %25 = tpu.matmul %23, %24, %cst_20 {dimension_numbers = #tpu.dot_dimension_numbers<[1], [0], [0], [1], [0, 0, 1, 1], [], []>} : vector<8x32xbf16>, vector<32x128xbf16>, vector<8x128xf32> -> vector<8x128xf32>
      %c0_21 = arith.constant 0 : index
      %c0_22 = arith.constant 0 : index
      %26 = vector.load %arg6[%c0_21, %c0_22] : memref<1x128xf32, #tpu.memory_space<vmem>>, vector<1x128xf32>
      %27 = vector.broadcast %26 : vector<1x128xf32> to vector<8x128xf32>
      %28 = arith.addf %25, %27 : vector<8x128xf32>
      %c0_23 = arith.constant 0 : index
      %c0_24 = arith.constant 0 : index
      %29 = vector.load %arg7[%c0_23, %c0_24] : memref<8x128xf32, #tpu.memory_space<vmem>>, vector<8x128xf32>
      tpu.vector_store %arg7[%c0_23, %c0_24], %28 {strides = array<i32>} : memref<8x128xf32, #tpu.memory_space<vmem>>, vector<8x128xf32>,
    } else {
    }
    return
  }
  func.func @transform_0(%arg0: i32, %arg1: i32) -> (i32, i32, i32) {
    %c0_i32 = arith.constant 0 : i32
    %c0_i32_0 = arith.constant 0 : i32
    return %arg0, %arg1, %c0_i32 : i32, i32, i32
  }
  func.func @transform_1(%arg0: i32, %arg1: i32) -> (i32, i32) {
    %c0_i32 = arith.constant 0 : i32
    %c0_i32_0 = arith.constant 0 : i32
    %c0_i32_1 = arith.constant 0 : i32
    return %c0_i32, %c0_i32_0 : i32, i32
  }
  func.func @transform_2(%arg0: i32, %arg1: i32) -> (i32, i32) {
    %c0_i32 = arith.constant 0 : i32
    %c0_i32_0 = arith.constant 0 : i32
    %c0_i32_1 = arith.constant 0 : i32
    return %c0_i32, %c0_i32_0 : i32, i32
  }
  func.func @transform_3(%arg0: i32, %arg1: i32) -> (i32, i32) {
    %c0_i32 = arith.constant 0 : i32
    %c0_i32_0 = arith.constant 0 : i32
    %c0_i32_1 = arith.constant 0 : i32
    return %c0_i32, %c0_i32_0 : i32, i32
  }
  func.func @transform_4(%arg0: i32, %arg1: i32) -> (i32, i32) {
    %c0_i32 = arith.constant 0 : i32
    %c0_i32_0 = arith.constant 0 : i32
    %c0_i32_1 = arith.constant 0 : i32
    return %c0_i32, %c0_i32_0 : i32, i32
  }
  func.func @transform_5(%arg0: i32, %arg1: i32) -> (i32, i32) {
    %c0_i32 = arith.constant 0 : i32
    %c0_i32_0 = arith.constant 0 : i32
    return %arg0, %c0_i32 : i32, i32
  }
}

</mosaic_0001>

<llo_original>
// kernel: tpu_custom_call.1
$region0: #{tpu_custom_call.1}
  #allocation0 [shape = 'u32[]', space=smem, size = 0x4, offset = 0x4, fixed_abs, tag = 'smem constant byte address 0x4 - core index']
  #allocation1 [shape = 'u32[72,128]{1,0:T(1,128)}', space=vmem, size = 0x9000, scoped, tag = 'internal scratch']
  #allocation2 [shape = 'f32[8,32]{1,0:T(8,128)}', space=vmem, size = 0x1000, scoped, tag = 'scratch operand']
  %s0 = inlined_call_operand.hbm [shape: bf16[2,8,32], index: 0, kind: input, shape index: {}]
  %s1 = inlined_call_operand.hbm [shape: bf16[32,32], index: 1, kind: input, shape index: {}]
  %s2 = inlined_call_operand.vmem [shape: f32[1,32], index: 2, kind: input, shape index: {}]
  %s3 = inlined_call_operand.hbm [shape: bf16[32,128], index: 3, kind: input, shape index: {}]
  %s4 = inlined_call_operand.vmem [shape: f32[1,128], index: 4, kind: input, shape index: {}]
  %s5 = inlined_call_operand.hbm [shape: f32[8,128], index: 5, kind: output, shape index: {}]
  %s6 = sld [smem:[#allocation0]]
  $region50: #{tpu_custom_call.1} parent=0
    _
  %s8 = ssub.s32 1, %s6
  %s9 = scalar_select 0, %s8, %s6
  $region1: #{tpu_custom_call.1} parent=0
    #allocation3 [shape = 'u8[16384]{0}', space=vmem, size = 0x4000, scoped, tag = 'input window, operand 0, single buffered']
    #allocation4 [shape = 's32[1]{0}', space=sflag, size = 0x4, scoped, tag = 'scoped memory for tpu_custom_call.1']
    #allocation5 [shape = 's32[1]{0}', space=sflag, size = 0x4, scoped, tag = 'scoped memory for tpu_custom_call.1']
    #allocation6 [shape = 'u8[8192]{0}', space=vmem, size = 0x2000, scoped, tag = 'input window, operand 1, single buffered']
    #allocation7 [shape = 's32[1]{0}', space=sflag, size = 0x4, scoped, tag = 'scoped memory for tpu_custom_call.1']
    #allocation8 [shape = 'u8[8192]{0}', space=vmem, size = 0x2000, scoped, tag = 'input window, operand 3, single buffered']
    #allocation9 [shape = 'u8[4096]{0}', space=vmem, size = 0x1000, scoped, tag = 'output window, operand 0, single buffered']
    %10 = vsyncpa [#allocation4], 0
    %11 = vsyncpa [#allocation7], 0
    %12 = vsyncpa [#allocation5], 0
    // Predicated region
    $region2: #{tpu_custom_call.1} parent=1 // pred_check
      _
    $region3: #{tpu_custom_call.1} parent=1 // pred_check_branch
      %14 = sbr.rel (0) target = $region5
    $region4: #{tpu_custom_call.1} parent=1 // pred_region
      %16 = vsyncadd [#allocation4], 384
      %s17 = sshll.u32 %s0, 4
      %s18 = int_to_ptr.hbm [resolvable:$true] %s17
      %s19 = sshll.u32 [#allocation3], 4
      %s20 = int_to_ptr.vmem [resolvable:$true] %s19
      %25 = dma.hbm_to_vmem [thread:$0]  %s18, 128, %s20, [#allocation4], 64, 64, 4
    $region5: #{tpu_custom_call.1} parent=1 // pred_fallthru
      _
    // Predicated region
    $region6: #{tpu_custom_call.1} parent=1 // pred_check
      _
    $region7: #{tpu_custom_call.1} parent=1 // pred_check_branch
      %27 = sbr.rel (0) target = $region9
    $region8: #{tpu_custom_call.1} parent=1 // pred_region
      %29 = vsyncadd [#allocation7], 0
      %s30 = sshll.u32 %s1, 4
      %s31 = int_to_ptr.hbm [resolvable:$true] %s30
      %s32 = sshll.u32 [#allocation6], 4
      %s33 = int_to_ptr.vmem [resolvable:$true] %s32
      %38 = dma.hbm_to_vmem [thread:$0]  %s31, 256, %s33, [#allocation7], 64, 64, 4
    $region9: #{tpu_custom_call.1} parent=1 // pred_fallthru
      _
    // Predicated region
    $region10: #{tpu_custom_call.1} parent=1 // pred_check
      _
    $region11: #{tpu_custom_call.1} parent=1 // pred_check_branch
      %40 = sbr.rel (0) target = $region13
    $region12: #{tpu_custom_call.1} parent=1 // pred_region
      _
    $region13: #{tpu_custom_call.1} parent=1 // pred_fallthru
      _
    // Predicated region
    $region14: #{tpu_custom_call.1} parent=1 // pred_check
      _
    $region15: #{tpu_custom_call.1} parent=1 // pred_check_branch
      %42 = sbr.rel (0) target = $region17
    $region16: #{tpu_custom_call.1} parent=1 // pred_region
      %44 = vsyncadd [#allocation7], 0
      %s45 = sshll.u32 %s3, 4
      %s46 = int_to_ptr.hbm [resolvable:$true] %s45
      %s47 = sshll.u32 [#allocation8], 4
      %s48 = int_to_ptr.vmem [resolvable:$true] %s47
      %53 = dma.hbm_to_vmem [thread:$0]  %s46, 256, %s48, [#allocation7], 64, 64, 4
    $region17: #{tpu_custom_call.1} parent=1 // pred_fallthru
      _
    // Predicated region
    $region18: #{tpu_custom_call.1} parent=1 // pred_check
      _
    $region19: #{tpu_custom_call.1} parent=1 // pred_check_branch
      %55 = sbr.rel (0) target = $region21
    $region20: #{tpu_custom_call.1} parent=1 // pred_region
      _
    $region21: #{tpu_custom_call.1} parent=1 // pred_fallthru
      _
    // Predicated region
    $region22: #{tpu_custom_call.1} parent=1 // pred_check
      _
    $region23: #{tpu_custom_call.1} parent=1 // pred_check_branch
      %57 = sbr.rel (0) target = $region25
    $region24: #{tpu_custom_call.1} parent=1 // pred_region
      %59 = dma.done [#allocation4], 512
    $region25: #{tpu_custom_call.1} parent=1 // pred_fallthru
      _
    // Predicated region
    $region26: #{tpu_custom_call.1} parent=1 // pred_check
      _
    $region27: #{tpu_custom_call.1} parent=1 // pred_check_branch
      %61 = sbr.rel (0) target = $region29
    $region28: #{tpu_custom_call.1} parent=1 // pred_region
      %63 = dma.done [#allocation7], 256
    $region29: #{tpu_custom_call.1} parent=1 // pred_fallthru
      _
    // Predicated region
    $region30: #{tpu_custom_call.1} parent=1 // pred_check
      _
    $region31: #{tpu_custom_call.1} parent=1 // pred_check_branch
      %65 = sbr.rel (0) target = $region33
    $region32: #{tpu_custom_call.1} parent=1 // pred_region
      %67 = dma.done [#allocation7], 256
    $region33: #{tpu_custom_call.1} parent=1 // pred_fallthru
      _
    %p69 = scmp.eq.s32.totalorder 0, 0
    // Predicated region
    $region34: #{tpu_custom_call.1} parent=1 // pred_check
      %p70 = pneg %p69
    $region35: #{tpu_custom_call.1} parent=1 // pred_check_branch
      %72 = sbr.rel (%p70) target = $region37
    $region36: #{tpu_custom_call.1} parent=1 // pred_region
      %vm73 = vcmask 261120
      %74 = vst.msk [vmem:[#allocation2] sm:$0xff] %vm73, 0.0
    $region37: #{tpu_custom_call.1} parent=1 // pred_fallthru
      _
    %v75 = vld [vmem:[#allocation3] sm:$0xf]
    %v76 = vld [vmem:[#allocation3 + $0x4] sm:$0xf]
    %v77 = vld [vmem:[#allocation3 + $0x8] sm:$0xf]
    %v78 = vld [vmem:[#allocation3 + $0xc] sm:$0xf]
    %v79 = vld [vmem:[#allocation3 + $0x10] sm:$0xf]
    %v80 = vld [vmem:[#allocation3 + $0x14] sm:$0xf]
    %v81 = vld [vmem:[#allocation3 + $0x18] sm:$0xf]
    %v82 = vld [vmem:[#allocation3 + $0x1c] sm:$0xf]
    %v83 = vunpack.c.l.bf16 %v75
    %v84 = vunpack.c.l.bf16 %v76
    %v85 = vunpack.c.l.bf16 %v77
    %v86 = vunpack.c.l.bf16 %v78
    %v87 = vunpack.c.l.bf16 %v79
    %v88 = vunpack.c.l.bf16 %v80
    %v89 = vunpack.c.l.bf16 %v81
    %v90 = vunpack.c.l.bf16 %v82
    %v91 = vld [vmem:[#allocation2] sm:$0xff]
    %vm92 = vcmask 261120
    %v93 = vsel %vm92, %v83, 0.0
    %v94 = vrot.slane %v93, 4
    %v95 = vadd.f32 %v93, %v94
    %v96 = vrot.slane %v95, 2
    %v97 = vadd.f32 %v95, %v96
    %v98 = vrot.slane %v97, 1
    %v99 = vadd.f32 %v97, %v98
    %v100 = vsel %vm92, %v84, 0.0
    %v101 = vrot.slane %v100, 4
    %v102 = vadd.f32 %v100, %v101
    %v103 = vrot.slane %v102, 2
    %v104 = vadd.f32 %v102, %v103
    %v105 = vrot.slane %v104, 1
    %v106 = vadd.f32 %v104, %v105
    %v107 = vsel %vm92, %v85, 0.0
    %v108 = vrot.slane %v107, 4
    %v109 = vadd.f32 %v107, %v108
    %v110 = vrot.slane %v109, 2
    %v111 = vadd.f32 %v109, %v110
    %v112 = vrot.slane %v111, 1
    %v113 = vadd.f32 %v111, %v112
    %v114 = vsel %vm92, %v86, 0.0
    %v115 = vrot.slane %v114, 4
    %v116 = vadd.f32 %v114, %v115
    %v117 = vrot.slane %v116, 2
    %v118 = vadd.f32 %v116, %v117
    %v119 = vrot.slane %v118, 1
    %v120 = vadd.f32 %v118, %v119
    %v121 = vsel %vm92, %v87, 0.0
    %v122 = vrot.slane %v121, 4
    %v123 = vadd.f32 %v121, %v122
    %v124 = vrot.slane %v123, 2
    %v125 = vadd.f32 %v123, %v124
    %v126 = vrot.slane %v125, 1
    %v127 = vadd.f32 %v125, %v126
    %v128 = vsel %vm92, %v88, 0.0
    %v129 = vrot.slane %v128, 4
    %v130 = vadd.f32 %v128, %v129
    %v131 = vrot.slane %v130, 2
    %v132 = vadd.f32 %v130, %v131
    %v133 = vrot.slane %v132, 1
    %v134 = vadd.f32 %v132, %v133
    %v135 = vsel %vm92, %v89, 0.0
    %v136 = vrot.slane %v135, 4
    %v137 = vadd.f32 %v135, %v136
    %v138 = vrot.slane %v137, 2
    %v139 = vadd.f32 %v137, %v138
    %v140 = vrot.slane %v139, 1
    %v141 = vadd.f32 %v139, %v140
    %v142 = vsel %vm92, %v90, 0.0
    %v143 = vrot.slane %v142, 4
    %v144 = vadd.f32 %v142, %v143
    %v145 = vrot.slane %v144, 2
    %v146 = vadd.f32 %v144, %v145
    %v147 = vrot.slane %v146, 1
    %v148 = vadd.f32 %v146, %v147
    %vm157 = vcmask 1041409
    %v158 = vsel %vm157, %v106, %v99
    %vm159 = vcmask 1042434
    %v160 = vsel %vm159, %v113, %v158
    %vm161 = vcmask 1043459
    %v162 = vsel %vm161, %v120, %v160
    %vm163 = vcmask 1044484
    %v164 = vsel %vm163, %v127, %v162
    %vm165 = vcmask 1045509
    %v166 = vsel %vm165, %v134, %v164
    %vm167 = vcmask 1046534
    %v168 = vsel %vm167, %v141, %v166
    %vm169 = vcmask 1047559
    %v170 = vsel %vm169, %v148, %v168
    %v172 = vadd.f32 %v91, %v170
    %173 = vst.msk [vmem:[#allocation2] sm:$0xff] %vm92, %v172
    // Predicated region
    $region38: #{tpu_custom_call.1} parent=1 // pred_check
      %p174 = pneg %p69
    $region39: #{tpu_custom_call.1} parent=1 // pred_check_branch
      %176 = sbr.rel (%p174) target = $region41
    $region40: #{tpu_custom_call.1} parent=1 // pred_region
      %v177 = vld [vmem:[#allocation2] sm:$0xff]
      %v178 = vmul.f32 %v177, 0.125
      %v179 = vpack.c.bf16 %v178, %v178
      %v180 = vld [vmem:[#allocation6] sm:$0xf]
      %v181 = vld [vmem:[#allocation6 + $0x4] sm:$0xf]
      %v182 = vld [vmem:[#allocation6 + $0x8] sm:$0xf]
      %v183 = vld [vmem:[#allocation6 + $0xc] sm:$0xf]
      %v184 = vld [vmem:[%s2] sm:$0x1]
      %v186 = vperm.slane %v184, 0
      %v192 = vunpack.c.l.b16 %v180
      %v193 = vunpack.c.l.b16 %v181
      %v194 = vunpack.c.l.b16 %v182
      %v195 = vunpack.c.l.b16 %v183
      %v196 = vpack.c.b16 %v193, %v192
      %v197 = vpack.c.b16 %v195, %v194
      %v201 = vsel %vm92, %v179, 0
      %203 = vmatpush.bf16.msra.mxu0 0
      %204 = vmatpush.bf16.msra.mxu0 0
      %205 = vmatpush.bf16.msra.mxu0 0
      %206 = vmatpush.bf16.msra.mxu0 0
      %207 = vmatpush.bf16.msra.mxu0 0
      %208 = vmatpush.bf16.msra.mxu0 0
      %209 = vmatpush.bf16.msra.mxu0 %v197
      %210 = vmatpush.bf16.msra.mxu0 %v196
      %211 = vmatmul.bf16.gmra.mxu0 %v201
      %v212 = vpop.f32.mrf.mxu0
      %v213 = vadd.f32 %v186, %v212
      %v214 = vpop.f32.mrf.mxu0
      %215 = vdwg.mxu0
      %v216 = vmax.f32 %v213, 0.0
      %v217 = vpack.c.bf16 %v216, %v216
      %v218 = vld [vmem:[#allocation8] sm:$0xf]
      %v219 = vld [vmem:[#allocation8 + $0x4] sm:$0xf]
      %v220 = vld [vmem:[#allocation8 + $0x8] sm:$0xf]
      %v221 = vld [vmem:[#allocation8 + $0xc] sm:$0xf]
      %v222 = vld [vmem:[%s4] sm:$0x1]
      %v224 = vperm.slane %v222, 0
      %v230 = vunpack.c.l.b16 %v218
      %v231 = vunpack.c.l.b16 %v219
      %v232 = vunpack.c.l.b16 %v220
      %v233 = vunpack.c.l.b16 %v221
      %v234 = vpack.c.b16 %v231, %v230
      %v235 = vpack.c.b16 %v233, %v232
      %v239 = vsel %vm92, %v217, 0
      %241 = vmatpush.bf16.msra.mxu0 0
      %242 = vmatpush.bf16.msra.mxu0 0
      %243 = vmatpush.bf16.msra.mxu0 0
      %244 = vmatpush.bf16.msra.mxu0 0
      %245 = vmatpush.bf16.msra.mxu0 0
      %246 = vmatpush.bf16.msra.mxu0 0
      %247 = vmatpush.bf16.msra.mxu0 %v235
      %248 = vmatpush.bf16.msra.mxu0 %v234
      %249 = vmatmul.bf16.gmra.mxu0 %v239
      %v250 = vpop.f32.mrf.mxu0
      %v251 = vadd.f32 %v224, %v250
      %v252 = vpop.f32.mrf.mxu0
      %253 = vdwg.mxu0
      %254 = vst [vmem:[#allocation9] sm:$0xff] %v251
    $region41: #{tpu_custom_call.1} parent=1 // pred_fallthru
      _
    // Predicated region
    $region42: #{tpu_custom_call.1} parent=1 // pred_check
      _
    $region43: #{tpu_custom_call.1} parent=1 // pred_check_branch
      %256 = sbr.rel (0) target = $region45
    $region44: #{tpu_custom_call.1} parent=1 // pred_region
      %258 = vsyncadd [#allocation5], 0
      %s260 = sshll.u32 [#allocation9], 4
      %s261 = int_to_ptr.vmem [resolvable:$true] %s260
      %s262 = sshll.u32 %s5, 4
      %s263 = int_to_ptr.hbm [resolvable:$true] %s262
      %265 = dma.vmem_to_hbm [thread:$0]  %s261, 128, %s263, [#allocation5]
    $region45: #{tpu_custom_call.1} parent=1 // pred_fallthru
      _
    // Predicated region
    $region46: #{tpu_custom_call.1} parent=1 // pred_check
      _
    $region47: #{tpu_custom_call.1} parent=1 // pred_check_branch
      %267 = sbr.rel (0) target = $region49
    $region48: #{tpu_custom_call.1} parent=1 // pred_region
      %269 = dma.done [#allocation5], 128
    $region49: #{tpu_custom_call.1} parent=1 // pred_fallthru
      _
    %270 = vsyncpa [#allocation4], 1
    %271 = vsyncpa [#allocation7], 1
    %272 = vsyncpa [#allocation5], 1

</llo_original>
